<compile_context>
chip_gen: v5e
topology: v5e:2x2
jax: 0.10.0
libtpu: 0.0.40
codegen_flags: <defaults>
</compile_context>

<pallas_src>
import functools
from typing import NamedTuple

import jax
import jax.numpy as jnp
from jax import lax
from jax.experimental import pallas as pl
from jax.experimental.pallas import tpu as pltpu

LANE = 128


def _round_up(x, m):
    return (x + m - 1) // m * m


class LayerMeta(NamedTuple):
    dilation: int
    kernel_size: int
    c_in: int
    c_out: int
    c_in_p: int
    c_out_p: int
    dense: bool


# ---------------------------------------------------------------------------
# One-time parameter prep (hoisted out of the per-call path)
# ---------------------------------------------------------------------------
def prepare_tcn_params(params, in_features):
    """params: list of (w:(K,Cin,Cout) f32, b:(Cout,) f32, dilation:int).

    Returns (flat_weight_bias_tuple, meta_tuple).  Weights are padded to
    lane multiples, im2col-flattened, and stored as bf16 for MXU feeds.
    """
    flat = []
    meta = []
    c_prev = in_features
    c_prev_p = _round_up(in_features, LANE)
    for (w, b, dil) in params:
        k_, c_in, c_out = w.shape
        assert c_in == c_prev, (c_in, c_prev)
        c_out_p = _round_up(c_out, LANE)
        dense = k_ * c_in <= LANE
        w32 = w.astype(jnp.float32)
        if dense:
            # Row (k*c_in + c) of the matrix multiplies lane (k*c_in + c) of
            # the densely packed taps slab.
            w_flat = jnp.zeros((c_prev_p, c_out_p), jnp.float32)
            for k in range(k_):
                w_flat = w_flat.at[k * c_in:(k + 1) * c_in, :c_out].set(w32[k])
        else:
            wp = jnp.zeros((k_, c_prev_p, c_out_p), jnp.float32)
            wp = wp.at[:, :c_in, :c_out].set(w32)
            w_flat = wp.reshape(k_ * c_prev_p, c_out_p)
        b_row = jnp.zeros((1, c_out_p), jnp.float32).at[0, :c_out].set(
            b.astype(jnp.float32))
        flat += [w_flat.astype(jnp.bfloat16), b_row]
        meta.append(LayerMeta(int(dil), int(k_), int(c_in), int(c_out),
                              int(c_prev_p), int(c_out_p), bool(dense)))
        c_prev, c_prev_p = c_out, c_out_p
    return tuple(flat), tuple(meta)


# ---------------------------------------------------------------------------
# Fused Pallas kernel: all conv+ReLU layers + AdaptiveAvgPool1d(1)
# ---------------------------------------------------------------------------
def _tcn_fused_kernel(*refs, B, L, meta):
    """refs = (x, w0, b0, w1, b1, ..., out)

    x   : (B*L, c0_p)  f32 flat activation (batch folded into matmul M dim)
    w_i : bf16 im2col weights (c_in_p, c_out_p) dense or (K*c_in_p, c_out_p)
    b_i : (1, c_out_p) f32 bias
    out : (B, c_last_p) f32 pooled output
    """
    n_layers = len(meta)
    x_ref = refs[0]
    w_refs = [refs[1 + 2 * i] for i in range(n_layers)]
    b_refs = [refs[2 + 2 * i] for i in range(n_layers)]
    o_ref = refs[1 + 2 * n_layers]

    M = x_ref.shape[0]
    h = x_ref[...]                                          # (M, c0_p) f32

    # Row position inside its own sequence (hoisted once) and one boolean
    # validity mask per *distinct* nonzero tap offset (JAX won't CSE these).
    t = lax.broadcasted_iota(jnp.int32, (M, 1), 0) % L
    all_offsets = {k * m.dilation - m.dilation * (m.kernel_size - 1) // 2
                   for m in meta for k in range(m.kernel_size)}
    valid = {off: jnp.logical_and(t + off >= 0, t + off < L)
             for off in sorted(all_offsets) if off != 0}

    def tap_at(hcur, off):
        # s[r] = hcur[r + off]; rows whose source falls outside the row's own
        # sequence are zeroed (== Conv1d zero padding, and it also blocks
        # cross-batch leakage in the flat (B*L, C) layout).  The row shift is
        # an XLU sublane rotate instead of slice+zero-concat VMEM copies.
        if off == 0:
            return hcur
        s = pltpu.roll(hcur, shift=(-off) % M, axis=0)
        return jnp.where(valid[off], s, 0.0)

    for i, m in enumerate(meta):
        K, d = m.kernel_size, m.dilation
        pad = d * (K - 1) // 2
        w = w_refs[i][...]                                   # bf16
        if m.dense:
            # Dense im2col: tap k occupies lanes [k*c_in, (k+1)*c_in) of a
            # single lane-width slab (lanes >= c_in are guaranteed zero, so
            # the lane-rotate wrap is harmless) -> one matmul of contraction
            # depth c_in_p instead of K*c_in_p.
            taps = None
            for k in range(K):
                tap = tap_at(h, k * d - pad)
                if k * m.c_in:
                    tap = pltpu.roll(tap, shift=k * m.c_in, axis=1)
                taps = tap if taps is None else taps + tap
            acc = jnp.dot(taps.astype(jnp.bfloat16), w,
                          preferred_element_type=jnp.float32)
        else:
            # Wide layers: per-tap accumulated matmuls (no K-wide taps slab).
            cp = m.c_in_p
            acc = None
            for k in range(K):
                tap = tap_at(h, k * d - pad)
                part = jnp.dot(tap.astype(jnp.bfloat16),
                               w[k * cp:(k + 1) * cp, :],
                               preferred_element_type=jnp.float32)
                acc = part if acc is None else acc + part
        h = jnp.maximum(acc + b_refs[i][...], 0.0)           # f32 bias + ReLU

    # AdaptiveAvgPool1d(1): per-sequence mean over L as a sublane reduce.
    pooled = jnp.mean(h.reshape(B, L, h.shape[-1]), axis=1)  # (B, c_last_p)
    o_ref[...] = pooled.astype(o_ref.dtype)


# ---------------------------------------------------------------------------
# Forward wrapper: one fused pallas_call (jitted; weight prep already hoisted)
# ---------------------------------------------------------------------------
@functools.partial(jax.jit, static_argnums=(2,))
def tcn_encoder_forward(x, flat_wb, meta):
    """x: (B, seq_len, features).  Returns (B, C_last, 1) like TCNEncoder."""
    B, L, Cin = x.shape
    c0_p = meta[0].c_in_p
    c_last = meta[-1].c_out
    c_last_p = meta[-1].c_out_p
    M = B * L
    # NOTE: for production L, tile M into a leading "parallel" grid axis with
    # halo = max(dilation)*(K-1)//2 rows and mark it parallel for v7x's 2 TCs.

    x_flat = x.reshape(M, Cin).astype(jnp.float32)
    x_flat = jnp.pad(x_flat, ((0, 0), (0, c0_p - Cin)))      # lane-dense input

    in_specs = [pl.BlockSpec((M, c0_p), lambda i: (0, 0))]
    for m in meta:
        w_rows = m.c_in_p if m.dense else m.kernel_size * m.c_in_p
        in_specs += [
            pl.BlockSpec((w_rows, m.c_out_p), lambda i: (0, 0)),
            pl.BlockSpec((1, m.c_out_p), lambda i: (0, 0)),
        ]

    kernel = functools.partial(_tcn_fused_kernel, B=B, L=L, meta=meta)
    out = pl.pallas_call(
        kernel,
        out_shape=jax.ShapeDtypeStruct((B, c_last_p), jnp.float32),
        grid_spec=pltpu.PrefetchScalarGridSpec(
            num_scalar_prefetch=0,
            grid=(1,),
            in_specs=in_specs,
            out_specs=pl.BlockSpec((B, c_last_p), lambda i: (0, 0)),
        ),
        compiler_params=pltpu.CompilerParams(
            dimension_semantics=("arbitrary",),
            vmem_limit_bytes=32 * 1024 * 1024,
        ),
    )(x_flat, *flat_wb)

    return out[:, :c_last][:, :, None]                        # (B, C_last, 1)


# ---------------------------------------------------------------------------
# Reference (pure JAX) for validation
# ---------------------------------------------------------------------------
def reference_forward(x, params):
    h = jnp.transpose(x, (0, 2, 1))  # (B, C, L) NCL, mirrors PyTorch permute
    for (w, b, dil) in params:
        K = w.shape[0]
        pad = dil * (K - 1) // 2
        w_oik = jnp.transpose(w, (2, 1, 0))  # (Cout, Cin, K)
        h = lax.conv_general_dilated(
            h, w_oik, window_strides=(1,), padding=[(pad, pad)],
            rhs_dilation=(dil,),
            dimension_numbers=("NCH", "OIH", "NCH"))
        h = jnp.maximum(h + b[None, :, None], 0.0)
    return jnp.mean(h, axis=-1, keepdims=True)  # (B, C, 1)


# ---------------------------------------------------------------------------
# Main
# ---------------------------------------------------------------------------
if __name__ == "__main__":
    B, SEQ_LEN, FEATURES = 2, 16, 4
    HIDDEN = 32
    K = 3

    key = jax.random.PRNGKey(0)
    kx, kw1, kb1, kw2, kb2 = jax.random.split(key, 5)

    x = jax.random.normal(kx, (B, SEQ_LEN, FEATURES), dtype=jnp.float32)

    # Synthetic TCN encoder: two dilated Conv1d+ReLU blocks, weights stored
    # as (K, Cin, Cout) for channels-last matmul.
    w1 = 0.1 * jax.random.normal(kw1, (K, FEATURES, HIDDEN), dtype=jnp.float32)
    b1 = 0.05 * jax.random.normal(kb1, (HIDDEN,), dtype=jnp.float32)
    w2 = 0.1 * jax.random.normal(kw2, (K, HIDDEN, HIDDEN), dtype=jnp.float32)
    b2 = 0.05 * jax.random.normal(kb2, (HIDDEN,), dtype=jnp.float32)

    params = [(w1, b1, 1), (w2, b2, 2)]  # (weight, bias, dilation)

    # One-time prep (padded/flattened bf16 weights), then the jitted forward.
    flat_wb, meta = prepare_tcn_params(params, in_features=FEATURES)

    out = tcn_encoder_forward(x, flat_wb, meta)
    out = jax.block_until_ready(out)

    ref = reference_forward(x, params)
    assert out.shape == (B, HIDDEN, 1), out.shape
    max_err = float(jnp.max(jnp.abs(out - ref)))
    # bf16 MXU feeds with f32 accumulation: relaxed tolerance vs f32 reference.
    assert jnp.allclose(out, ref, atol=2e-2, rtol=2e-2), max_err

    print("KERNEL_OK")
</pallas_src>

<mosaic_0001>
module attributes {stable_mosaic.version = 11 : i64} {
  func.func @_tcn_fused_kernel(%arg0: i32, %arg1: memref<32x128xf32, #tpu.memory_space<vmem>>, %arg2: memref<128x128xbf16, #tpu.memory_space<vmem>>, %arg3: memref<1x128xf32, #tpu.memory_space<vmem>>, %arg4: memref<128x128xbf16, #tpu.memory_space<vmem>>, %arg5: memref<1x128xf32, #tpu.memory_space<vmem>>, %arg6: memref<2x128xf32, #tpu.memory_space<vmem>>) attributes {dimension_semantics = [#tpu.dimension_semantics<arbitrary>], iteration_bounds = array<i64: 1>, scalar_prefetch = 0 : i64, scratch_operands = 0 : i64, tpu.core_type = #tpu.core_type<tc>, window_params = [{pipeline_mode = #tpu.pipeline_mode<synchronous>, transform_indices = @transform_0, window_bounds = array<i64: 32, 128>}, {pipeline_mode = #tpu.pipeline_mode<synchronous>, transform_indices = @transform_1, window_bounds = array<i64: 128, 128>}, {pipeline_mode = #tpu.pipeline_mode<synchronous>, transform_indices = @transform_2, window_bounds = array<i64: 1, 128>}, {pipeline_mode = #tpu.pipeline_mode<synchronous>, transform_indices = @transform_3, window_bounds = array<i64: 128, 128>}, {pipeline_mode = #tpu.pipeline_mode<synchronous>, transform_indices = @transform_4, window_bounds = array<i64: 1, 128>}, {pipeline_mode = #tpu.pipeline_mode<synchronous>, transform_indices = @transform_5, window_bounds = array<i64: 2, 128>}]} {
    %c0 = arith.constant 0 : index
    %c0_0 = arith.constant 0 : index
    %0 = vector.load %arg1[%c0, %c0_0] : memref<32x128xf32, #tpu.memory_space<vmem>>, vector<32x128xf32>
    %1 = tpu.iota {dimensions = array<i32: 0>} : vector<32x1xi32>
    %c16_i32 = arith.constant 16 : i32
    %c0_i32 = arith.constant 0 : i32
    %2 = arith.cmpi eq, %c16_i32, %c0_i32 : i32
    %c1_i32 = arith.constant 1 : i32
    %3 = arith.select %2, %c1_i32, %c16_i32 : i32
    %4 = vector.broadcast %3 : i32 to vector<32x1xi32>
    %5 = arith.remsi %1, %4 : vector<32x1xi32>
    %c0_i32_1 = arith.constant 0 : i32
    %6 = vector.broadcast %c0_i32_1 : i32 to vector<32x1xi32>
    %7 = arith.cmpi ne, %5, %6 : vector<32x1xi32>
    %c0_i32_2 = arith.constant 0 : i32
    %8 = vector.broadcast %c0_i32_2 : i32 to vector<32x1xi32>
    %9 = arith.cmpi slt, %5, %8 : vector<32x1xi32>
    %c0_i32_3 = arith.constant 0 : i32
    %10 = arith.cmpi slt, %3, %c0_i32_3 : i32
    %11 = vector.broadcast %10 : i1 to vector<32x1xi1>
    %12 = vector.broadcast %11 : vector<32x1xi1> to vector<32x1xi1>
    %13 = arith.xori %9, %12 : vector<32x1xi1>
    %14 = arith.andi %13, %7 : vector<32x1xi1>
    %15 = vector.broadcast %3 : i32 to vector<32x1xi32>
    %16 = arith.addi %5, %15 : vector<32x1xi32>
    %17 = arith.select %14, %16, %5 : vector<32x1xi1>, vector<32x1xi32>
    %c-2_i32 = arith.constant -2 : i32
    %18 = vector.broadcast %c-2_i32 : i32 to vector<32x1xi32>
    %19 = arith.addi %17, %18 : vector<32x1xi32>
    %c0_i32_4 = arith.constant 0 : i32
    %20 = vector.broadcast %c0_i32_4 : i32 to vector<32x1xi32>
    %21 = arith.cmpi sge, %19, %20 : vector<32x1xi32>
    %c-2_i32_5 = arith.constant -2 : i32
    %22 = vector.broadcast %c-2_i32_5 : i32 to vector<32x1xi32>
    %23 = arith.addi %17, %22 : vector<32x1xi32>
    %c16_i32_6 = arith.constant 16 : i32
    %24 = vector.broadcast %c16_i32_6 : i32 to vector<32x1xi32>
    %25 = arith.cmpi slt, %23, %24 : vector<32x1xi32>
    %26 = arith.andi %21, %25 : vector<32x1xi1>
    %c-1_i32 = arith.constant -1 : i32
    %27 = vector.broadcast %c-1_i32 : i32 to vector<32x1xi32>
    %28 = arith.addi %17, %27 : vector<32x1xi32>
    %c0_i32_7 = arith.constant 0 : i32
    %29 = vector.broadcast %c0_i32_7 : i32 to vector<32x1xi32>
    %30 = arith.cmpi sge, %28, %29 : vector<32x1xi32>
    %c-1_i32_8 = arith.constant -1 : i32
    %31 = vector.broadcast %c-1_i32_8 : i32 to vector<32x1xi32>
    %32 = arith.addi %17, %31 : vector<32x1xi32>
    %c16_i32_9 = arith.constant 16 : i32
    %33 = vector.broadcast %c16_i32_9 : i32 to vector<32x1xi32>
    %34 = arith.cmpi slt, %32, %33 : vector<32x1xi32>
    %35 = arith.andi %30, %34 : vector<32x1xi1>
    %c1_i32_10 = arith.constant 1 : i32
    %36 = vector.broadcast %c1_i32_10 : i32 to vector<32x1xi32>
    %37 = arith.addi %17, %36 : vector<32x1xi32>
    %c0_i32_11 = arith.constant 0 : i32
    %38 = vector.broadcast %c0_i32_11 : i32 to vector<32x1xi32>
    %39 = arith.cmpi sge, %37, %38 : vector<32x1xi32>
    %c1_i32_12 = arith.constant 1 : i32
    %40 = vector.broadcast %c1_i32_12 : i32 to vector<32x1xi32>
    %41 = arith.addi %17, %40 : vector<32x1xi32>
    %c16_i32_13 = arith.constant 16 : i32
    %42 = vector.broadcast %c16_i32_13 : i32 to vector<32x1xi32>
    %43 = arith.cmpi slt, %41, %42 : vector<32x1xi32>
    %44 = arith.andi %39, %43 : vector<32x1xi1>
    %c2_i32 = arith.constant 2 : i32
    %45 = vector.broadcast %c2_i32 : i32 to vector<32x1xi32>
    %46 = arith.addi %17, %45 : vector<32x1xi32>
    %c0_i32_14 = arith.constant 0 : i32
    %47 = vector.broadcast %c0_i32_14 : i32 to vector<32x1xi32>
    %48 = arith.cmpi sge, %46, %47 : vector<32x1xi32>
    %c2_i32_15 = arith.constant 2 : i32
    %49 = vector.broadcast %c2_i32_15 : i32 to vector<32x1xi32>
    %50 = arith.addi %17, %49 : vector<32x1xi32>
    %c16_i32_16 = arith.constant 16 : i32
    %51 = vector.broadcast %c16_i32_16 : i32 to vector<32x1xi32>
    %52 = arith.cmpi slt, %50, %51 : vector<32x1xi32>
    %53 = arith.andi %48, %52 : vector<32x1xi1>
    %c0_17 = arith.constant 0 : index
    %c0_18 = arith.constant 0 : index
    %54 = vector.load %arg2[%c0_17, %c0_18] : memref<128x128xbf16, #tpu.memory_space<vmem>>, vector<128x128xbf16>
    %c1_i32_19 = arith.constant 1 : i32
    %55 = tpu.dynamic_rotate %0 by %c1_i32_19 dim 0 : vector<32x128xf32>, i32 -> vector<32x128xf32>
    %cst = arith.constant 0.000000e+00 : f32
    %56 = vector.shape_cast %35 : vector<32x1xi1> to vector<32x1xi1>
    %57 = vector.broadcast %56 : vector<32x1xi1> to vector<32x128xi1>
    %58 = vector.broadcast %cst : f32 to vector<32x128xf32>
    %59 = arith.select %57, %55, %58 : vector<32x128xi1>, vector<32x128xf32>
    %c4_i32 = arith.constant 4 : i32
    %60 = tpu.dynamic_rotate %0 by %c4_i32 dim 1 : vector<32x128xf32>, i32 -> vector<32x128xf32>
    %61 = arith.addf %59, %60 : vector<32x128xf32>
    %c31_i32 = arith.constant 31 : i32
    %62 = tpu.dynamic_rotate %0 by %c31_i32 dim 0 : vector<32x128xf32>, i32 -> vector<32x128xf32>
    %cst_20 = arith.constant 0.000000e+00 : f32
    %63 = vector.shape_cast %44 : vector<32x1xi1> to vector<32x1xi1>
    %64 = vector.broadcast %63 : vector<32x1xi1> to vector<32x128xi1>
    %65 = vector.broadcast %cst_20 : f32 to vector<32x128xf32>
    %66 = arith.select %64, %62, %65 : vector<32x128xi1>, vector<32x128xf32>
    %c8_i32 = arith.constant 8 : i32
    %67 = tpu.dynamic_rotate %66 by %c8_i32 dim 1 : vector<32x128xf32>, i32 -> vector<32x128xf32>
    %68 = arith.addf %61, %67 : vector<32x128xf32>
    %69 = arith.truncf %68 : vector<32x128xf32> to vector<32x128xbf16>
    %cst_21 = arith.constant dense<0.000000e+00> : vector<32x128xf32>
    %70 = tpu.matmul %69, %54, %cst_21 {dimension_numbers = #tpu.dot_dimension_numbers<[1], [0], [0], [1], [0, 0, 1, 1], [], []>} : vector<32x128xbf16>, vector<128x128xbf16>, vector<32x128xf32> -> vector<32x128xf32>
    %c0_22 = arith.constant 0 : index
    %c0_23 = arith.constant 0 : index
    %71 = vector.load %arg3[%c0_22, %c0_23] : memref<1x128xf32, #tpu.memory_space<vmem>>, vector<1x128xf32>
    %72 = vector.broadcast %71 : vector<1x128xf32> to vector<32x128xf32>
    %73 = arith.addf %70, %72 : vector<32x128xf32>
    %cst_24 = arith.constant 0.000000e+00 : f32
    %74 = vector.broadcast %cst_24 : f32 to vector<32x128xf32>
    %75 = arith.maximumf %73, %74 : vector<32x128xf32>
    %c0_25 = arith.constant 0 : index
    %c0_26 = arith.constant 0 : index
    %76 = vector.load %arg4[%c0_25, %c0_26] : memref<128x128xbf16, #tpu.memory_space<vmem>>, vector<128x128xbf16>
    %c2_i32_27 = arith.constant 2 : i32
    %77 = tpu.dynamic_rotate %75 by %c2_i32_27 dim 0 : vector<32x128xf32>, i32 -> vector<32x128xf32>
    %cst_28 = arith.constant 0.000000e+00 : f32
    %78 = vector.shape_cast %26 : vector<32x1xi1> to vector<32x1xi1>
    %79 = vector.broadcast %78 : vector<32x1xi1> to vector<32x128xi1>
    %80 = vector.broadcast %cst_28 : f32 to vector<32x128xf32>
    %81 = arith.select %79, %77, %80 : vector<32x128xi1>, vector<32x128xf32>
    %c32_i32 = arith.constant 32 : i32
    %82 = tpu.dynamic_rotate %75 by %c32_i32 dim 1 : vector<32x128xf32>, i32 -> vector<32x128xf32>
    %83 = arith.addf %81, %82 : vector<32x128xf32>
    %c30_i32 = arith.constant 30 : i32
    %84 = tpu.dynamic_rotate %75 by %c30_i32 dim 0 : vector<32x128xf32>, i32 -> vector<32x128xf32>
    %cst_29 = arith.constant 0.000000e+00 : f32
    %85 = vector.shape_cast %53 : vector<32x1xi1> to vector<32x1xi1>
    %86 = vector.broadcast %85 : vector<32x1xi1> to vector<32x128xi1>
    %87 = vector.broadcast %cst_29 : f32 to vector<32x128xf32>
    %88 = arith.select %86, %84, %87 : vector<32x128xi1>, vector<32x128xf32>
    %c64_i32 = arith.constant 64 : i32
    %89 = tpu.dynamic_rotate %88 by %c64_i32 dim 1 : vector<32x128xf32>, i32 -> vector<32x128xf32>
    %90 = arith.addf %83, %89 : vector<32x128xf32>
    %91 = arith.truncf %90 : vector<32x128xf32> to vector<32x128xbf16>
    %cst_30 = arith.constant dense<0.000000e+00> : vector<32x128xf32>
    %92 = tpu.matmul %91, %76, %cst_30 {dimension_numbers = #tpu.dot_dimension_numbers<[1], [0], [0], [1], [0, 0, 1, 1], [], []>} : vector<32x128xbf16>, vector<128x128xbf16>, vector<32x128xf32> -> vector<32x128xf32>
    %c0_31 = arith.constant 0 : index
    %c0_32 = arith.constant 0 : index
    %93 = vector.load %arg5[%c0_31, %c0_32] : memref<1x128xf32, #tpu.memory_space<vmem>>, vector<1x128xf32>
    %94 = vector.broadcast %93 : vector<1x128xf32> to vector<32x128xf32>
    %95 = arith.addf %92, %94 : vector<32x128xf32>
    %cst_33 = arith.constant 0.000000e+00 : f32
    %96 = vector.broadcast %cst_33 : f32 to vector<32x128xf32>
    %97 = arith.maximumf %95, %96 : vector<32x128xf32>
    %98 = vector.shape_cast %97 : vector<32x128xf32> to vector<2x16x128xf32>
    %cst_34 = arith.constant dense<0.000000e+00> : vector<2x128xf32>
    %99 = vector.multi_reduction <add>, %98, %cst_34 [1] : vector<2x16x128xf32> to vector<2x128xf32>
    %cst_35 = arith.constant 1.600000e+01 : f32
    %100 = vector.broadcast %cst_35 : f32 to vector<2x128xf32>
    %101 = arith.divf %99, %100 : vector<2x128xf32>
    %c0_36 = arith.constant 0 : index
    %c0_37 = arith.constant 0 : index
    %102 = vector.load %arg6[%c0_36, %c0_37] : memref<2x128xf32, #tpu.memory_space<vmem>>, vector<2x128xf32>
    tpu.vector_store %arg6[%c0_36, %c0_37], %101 {strides = array<i32>} : memref<2x128xf32, #tpu.memory_space<vmem>>, vector<2x128xf32>,
    return
  }
  func.func @transform_0(%arg0: i32) -> (i32, i32) {
    %c0_i32 = arith.constant 0 : i32
    %c0_i32_0 = arith.constant 0 : i32
    %c0_i32_1 = arith.constant 0 : i32
    return %c0_i32, %c0_i32_0 : i32, i32
  }
  func.func @transform_1(%arg0: i32) -> (i32, i32) {
    %c0_i32 = arith.constant 0 : i32
    %c0_i32_0 = arith.constant 0 : i32
    %c0_i32_1 = arith.constant 0 : i32
    return %c0_i32, %c0_i32_0 : i32, i32
  }
  func.func @transform_2(%arg0: i32) -> (i32, i32) {
    %c0_i32 = arith.constant 0 : i32
    %c0_i32_0 = arith.constant 0 : i32
    %c0_i32_1 = arith.constant 0 : i32
    return %c0_i32, %c0_i32_0 : i32, i32
  }
  func.func @transform_3(%arg0: i32) -> (i32, i32) {
    %c0_i32 = arith.constant 0 : i32
    %c0_i32_0 = arith.constant 0 : i32
    %c0_i32_1 = arith.constant 0 : i32
    return %c0_i32, %c0_i32_0 : i32, i32
  }
  func.func @transform_4(%arg0: i32) -> (i32, i32) {
    %c0_i32 = arith.constant 0 : i32
    %c0_i32_0 = arith.constant 0 : i32
    %c0_i32_1 = arith.constant 0 : i32
    return %c0_i32, %c0_i32_0 : i32, i32
  }
  func.func @transform_5(%arg0: i32) -> (i32, i32) {
    %c0_i32 = arith.constant 0 : i32
    %c0_i32_0 = arith.constant 0 : i32
    %c0_i32_1 = arith.constant 0 : i32
    return %c0_i32, %c0_i32_0 : i32, i32
  }
}

</mosaic_0001>

<llo_original>
// kernel: tcn_encoder_forward.1
$region0: #{tcn_encoder_forward.1}
  #allocation0 [shape = 'u32[]', space=smem, size = 0x4, offset = 0x4, fixed_abs, tag = 'smem constant byte address 0x4 - core index']
  #allocation1 [shape = 'u32[72,128]{1,0:T(1,128)}', space=vmem, size = 0x9000, scoped, tag = 'internal scratch']
  %s0 = inlined_call_operand.vmem [shape: f32[32,128], index: 0, kind: input, shape index: {}]
  %s1 = inlined_call_operand.vmem [shape: bf16[128,128], index: 1, kind: input, shape index: {}]
  %s2 = inlined_call_operand.vmem [shape: f32[1,128], index: 2, kind: input, shape index: {}]
  %s3 = inlined_call_operand.hbm [shape: bf16[128,128], index: 3, kind: input, shape index: {}]
  %s4 = inlined_call_operand.vmem [shape: f32[1,128], index: 4, kind: input, shape index: {}]
  %s5 = inlined_call_operand.hbm [shape: f32[2,128], index: 5, kind: output, shape index: {}]
  %s6 = sld [smem:[#allocation0]]
  $region34: #{tcn_encoder_forward.1} parent=0
    _
  %s8 = ssub.s32 1, %s6
  %s9 = scalar_select 0, %s8, %s6
  $region1: #{tcn_encoder_forward.1} parent=0
    #allocation2 [shape = 'u8[32768]{0}', space=vmem, size = 0x8000, scoped, tag = 'input window, operand 3, single buffered']
    #allocation3 [shape = 's32[1]{0}', space=sflag, size = 0x4, scoped, tag = 'scoped memory for tcn_encoder_forward.1']
    #allocation4 [shape = 's32[1]{0}', space=sflag, size = 0x4, scoped, tag = 'scoped memory for tcn_encoder_forward.1']
    #allocation5 [shape = 'u8[1024]{0}', space=vmem, size = 0x400, scoped, tag = 'output window, operand 0, single buffered']
    %10 = vsyncpa [#allocation3], 0
    %11 = vsyncpa [#allocation4], 0
    // Predicated region
    $region2: #{tcn_encoder_forward.1} parent=1 // pred_check
      _
    $region3: #{tcn_encoder_forward.1} parent=1 // pred_check_branch
      %13 = sbr.rel (0) target = $region5
    $region4: #{tcn_encoder_forward.1} parent=1 // pred_region
      _
    $region5: #{tcn_encoder_forward.1} parent=1 // pred_fallthru
      _
    // Predicated region
    $region6: #{tcn_encoder_forward.1} parent=1 // pred_check
      _
    $region7: #{tcn_encoder_forward.1} parent=1 // pred_check_branch
      %15 = sbr.rel (0) target = $region9
    $region8: #{tcn_encoder_forward.1} parent=1 // pred_region
      _
    $region9: #{tcn_encoder_forward.1} parent=1 // pred_fallthru
      _
    // Predicated region
    $region10: #{tcn_encoder_forward.1} parent=1 // pred_check
      _
    $region11: #{tcn_encoder_forward.1} parent=1 // pred_check_branch
      %17 = sbr.rel (0) target = $region13
    $region12: #{tcn_encoder_forward.1} parent=1 // pred_region
      _
    $region13: #{tcn_encoder_forward.1} parent=1 // pred_fallthru
      _
    // Predicated region
    $region14: #{tcn_encoder_forward.1} parent=1 // pred_check
      _
    $region15: #{tcn_encoder_forward.1} parent=1 // pred_check_branch
      %19 = sbr.rel (0) target = $region17
    $region16: #{tcn_encoder_forward.1} parent=1 // pred_region
      %21 = vsyncadd [#allocation3], 0
      %s22 = sshll.u32 %s3, 4
      %s23 = int_to_ptr.hbm [resolvable:$true] %s22
      %s24 = sshll.u32 [#allocation2], 4
      %s25 = int_to_ptr.vmem [resolvable:$true] %s24
      %30 = dma.hbm_to_vmem [thread:$0]  %s23, 1024, %s25, [#allocation3], 64, 64, 4
    $region17: #{tcn_encoder_forward.1} parent=1 // pred_fallthru
      _
    // Predicated region
    $region18: #{tcn_encoder_forward.1} parent=1 // pred_check
      _
    $region19: #{tcn_encoder_forward.1} parent=1 // pred_check_branch
      %32 = sbr.rel (0) target = $region21
    $region20: #{tcn_encoder_forward.1} parent=1 // pred_region
      _
    $region21: #{tcn_encoder_forward.1} parent=1 // pred_fallthru
      _
    // Predicated region
    $region22: #{tcn_encoder_forward.1} parent=1 // pred_check
      _
    $region23: #{tcn_encoder_forward.1} parent=1 // pred_check_branch
      %34 = sbr.rel (0) target = $region25
    $region24: #{tcn_encoder_forward.1} parent=1 // pred_region
      %36 = dma.done [#allocation3], 1024
    $region25: #{tcn_encoder_forward.1} parent=1 // pred_fallthru
      _
    %v37 = vld [vmem:[%s0] sm:$0xff]
    %v38 = vld [vmem:[%s0 + $0x8] sm:$0xff]
    %v39 = vld [vmem:[%s0 + $0x10] sm:$0xff]
    %v40 = vld [vmem:[%s0 + $0x18] sm:$0xff]
    %v41 = vlaneseq
    %v42 = vshrl.u32 %v41, 7
    %v43 = vadd.s32 %v42, 8
    %v44 = vadd.s32 %v42, 16
    %v45 = vadd.s32 %v42, 24
    %vm46 = vcmp.lt.s32.totalorder %v42, 0
    %v47 = vsub.s32 0, %v42
    %v48 = vsel %vm46, %v47, %v42
    %v49 = vshrl.u32 %v48, 4
    %v50 = vand.u32 %v48, 15
    %v51 = vsub.s32 0, %v50
    %v52 = vsel %vm46, %v51, %v50
    %vm53 = vcmp.lt.s32.totalorder %v43, 0
    %v54 = vsub.s32 0, %v43
    %v55 = vsel %vm53, %v54, %v43
    %v56 = vshrl.u32 %v55, 4
    %v57 = vand.u32 %v55, 15
    %v58 = vsub.s32 0, %v57
    %v59 = vsel %vm53, %v58, %v57
    %vm60 = vcmp.lt.s32.totalorder %v44, 0
    %v61 = vsub.s32 0, %v44
    %v62 = vsel %vm60, %v61, %v44
    %v63 = vshrl.u32 %v62, 4
    %v64 = vand.u32 %v62, 15
    %v65 = vsub.s32 0, %v64
    %v66 = vsel %vm60, %v65, %v64
    %vm67 = vcmp.lt.s32.totalorder %v45, 0
    %v68 = vsub.s32 0, %v45
    %v69 = vsel %vm67, %v68, %v45
    %v70 = vshrl.u32 %v69, 4
    %v71 = vand.u32 %v69, 15
    %v72 = vsub.s32 0, %v71
    %v73 = vsel %vm67, %v72, %v71
    %vm74 = vcmp.ne.s32.totalorder %v52, 0
    %vm75 = vcmp.ne.s32.totalorder %v59, 0
    %vm76 = vcmp.ne.s32.totalorder %v66, 0
    %vm77 = vcmp.ne.s32.totalorder %v73, 0
    %vm78 = vcmp.lt.s32.totalorder %v52, 0
    %vm79 = vcmp.lt.s32.totalorder %v59, 0
    %vm80 = vcmp.lt.s32.totalorder %v66, 0
    %vm81 = vcmp.lt.s32.totalorder %v73, 0
    %vm82 = vmand %vm78, %vm74
    %vm83 = vmand %vm79, %vm75
    %vm84 = vmand %vm80, %vm76
    %vm85 = vmand %vm81, %vm77
    %v86 = vadd.s32 %v52, 16
    %v87 = vadd.s32 %v59, 16
    %v88 = vadd.s32 %v66, 16
    %v89 = vadd.s32 %v73, 16
    %v90 = vsel %vm82, %v86, %v52
    %v91 = vsel %vm83, %v87, %v59
    %v92 = vsel %vm84, %v88, %v66
    %v93 = vsel %vm85, %v89, %v73
    %v94 = vadd.s32 %v90, 4294967294
    %v95 = vadd.s32 %v91, 4294967294
    %v96 = vadd.s32 %v92, 4294967294
    %v97 = vadd.s32 %v93, 4294967294
    %vm98 = vcmp.ge.s32.totalorder %v94, 0
    %vm99 = vcmp.ge.s32.totalorder %v95, 0
    %vm100 = vcmp.ge.s32.totalorder %v96, 0
    %vm101 = vcmp.ge.s32.totalorder %v97, 0
    %vm102 = vcmp.lt.s32.totalorder %v94, 16
    %vm103 = vcmp.lt.s32.totalorder %v95, 16
    %vm104 = vcmp.lt.s32.totalorder %v96, 16
    %vm105 = vcmp.lt.s32.totalorder %v97, 16
    %vm106 = vmand %vm98, %vm102
    %vm107 = vmand %vm99, %vm103
    %vm108 = vmand %vm100, %vm104
    %vm109 = vmand %vm101, %vm105
    %v110 = vadd.s32 %v90, 4294967295
    %v111 = vadd.s32 %v91, 4294967295
    %v112 = vadd.s32 %v92, 4294967295
    %v113 = vadd.s32 %v93, 4294967295
    %vm114 = vcmp.ge.s32.totalorder %v110, 0
    %vm115 = vcmp.ge.s32.totalorder %v111, 0
    %vm116 = vcmp.ge.s32.totalorder %v112, 0
    %vm117 = vcmp.ge.s32.totalorder %v113, 0
    %vm118 = vcmp.lt.s32.totalorder %v110, 16
    %vm119 = vcmp.lt.s32.totalorder %v111, 16
    %vm120 = vcmp.lt.s32.totalorder %v112, 16
    %vm121 = vcmp.lt.s32.totalorder %v113, 16
    %vm122 = vmand %vm114, %vm118
    %vm123 = vmand %vm115, %vm119
    %vm124 = vmand %vm116, %vm120
    %vm125 = vmand %vm117, %vm121
    %v126 = vadd.s32 %v90, 1
    %v127 = vadd.s32 %v91, 1
    %v128 = vadd.s32 %v92, 1
    %v129 = vadd.s32 %v93, 1
    %vm130 = vcmp.ge.s32.totalorder %v126, 0
    %vm131 = vcmp.ge.s32.totalorder %v127, 0
    %vm132 = vcmp.ge.s32.totalorder %v128, 0
    %vm133 = vcmp.ge.s32.totalorder %v129, 0
    %vm134 = vcmp.lt.s32.totalorder %v126, 16
    %vm135 = vcmp.lt.s32.totalorder %v127, 16
    %vm136 = vcmp.lt.s32.totalorder %v128, 16
    %vm137 = vcmp.lt.s32.totalorder %v129, 16
    %vm138 = vmand %vm130, %vm134
    %vm139 = vmand %vm131, %vm135
    %vm140 = vmand %vm132, %vm136
    %vm141 = vmand %vm133, %vm137
    %v142 = vadd.s32 %v90, 2
    %v143 = vadd.s32 %v91, 2
    %v144 = vadd.s32 %v92, 2
    %v145 = vadd.s32 %v93, 2
    %vm146 = vcmp.ge.s32.totalorder %v142, 0
    %vm147 = vcmp.ge.s32.totalorder %v143, 0
    %vm148 = vcmp.ge.s32.totalorder %v144, 0
    %vm149 = vcmp.ge.s32.totalorder %v145, 0
    %vm150 = vcmp.lt.s32.totalorder %v142, 16
    %vm151 = vcmp.lt.s32.totalorder %v143, 16
    %vm152 = vcmp.lt.s32.totalorder %v144, 16
    %vm153 = vcmp.lt.s32.totalorder %v145, 16
    %vm154 = vmand %vm146, %vm150
    %vm155 = vmand %vm147, %vm151
    %vm156 = vmand %vm148, %vm152
    %vm157 = vmand %vm149, %vm153
    %v158 = vld [vmem:[%s1] sm:$0xf]
    %v159 = vld [vmem:[%s1 + $0x4] sm:$0xf]
    %v160 = vld [vmem:[%s1 + $0x8] sm:$0xf]
    %v161 = vld [vmem:[%s1 + $0xc] sm:$0xf]
    %v162 = vld [vmem:[%s1 + $0x10] sm:$0xf]
    %v163 = vld [vmem:[%s1 + $0x14] sm:$0xf]
    %v164 = vld [vmem:[%s1 + $0x18] sm:$0xf]
    %v165 = vld [vmem:[%s1 + $0x1c] sm:$0xf]
    %v166 = vld [vmem:[%s1 + $0x20] sm:$0xf]
    %v167 = vld [vmem:[%s1 + $0x24] sm:$0xf]
    %v168 = vld [vmem:[%s1 + $0x28] sm:$0xf]
    %v169 = vld [vmem:[%s1 + $0x2c] sm:$0xf]
    %v170 = vld [vmem:[%s1 + $0x30] sm:$0xf]
    %v171 = vld [vmem:[%s1 + $0x34] sm:$0xf]
    %v172 = vld [vmem:[%s1 + $0x38] sm:$0xf]
    %v173 = vld [vmem:[%s1 + $0x3c] sm:$0xf]
    %v174 = vrot.slane %v37, 7
    %v175 = vrot.slane %v38, 7
    %v176 = vrot.slane %v39, 7
    %v177 = vrot.slane %v40, 7
    %vm178 = vcmp.lt.s32.totalorder %v42, 1
    %v179 = vsel %vm178, %v176, %v177
    %v180 = vsel %vm178, %v175, %v176
    %v181 = vsel %vm178, %v174, %v175
    %v182 = vsel %vm178, %v177, %v174
    %v183 = vsel %vm122, 1, 0
    %v184 = vsel %vm123, 1, 0
    %v185 = vsel %vm124, 1, 0
    %v186 = vsel %vm125, 1, 0
    %vm187 = vcmp.eq.s32.totalorder %v183, 1
    %vm188 = vcmp.eq.s32.totalorder %v184, 1
    %vm189 = vcmp.eq.s32.totalorder %v185, 1
    %vm190 = vcmp.eq.s32.totalorder %v186, 1
    %v191 = vsel %vm187, %v182, 0.0
    %v192 = vsel %vm188, %v181, 0.0
    %v193 = vsel %vm189, %v180, 0.0
    %v194 = vsel %vm190, %v179, 0.0
    %195 = vrot.lane.b32.xlu0 %v37, 4
    %v196 = vpop.permute.xlu0 %195
    %197 = vrot.lane.b32.xlu0 %v38, 4
    %v198 = vpop.permute.xlu0 %197
    %199 = vrot.lane.b32.xlu0 %v39, 4
    %v200 = vpop.permute.xlu0 %199
    %201 = vrot.lane.b32.xlu0 %v40, 4
    %v202 = vpop.permute.xlu0 %201
    %v203 = vadd.f32 %v191, %v196
    %v204 = vadd.f32 %v192, %v198
    %v205 = vadd.f32 %v193, %v200
    %v206 = vadd.f32 %v194, %v202
    %v207 = vrot.slane %v37, 1
    %v208 = vrot.slane %v38, 1
    %v209 = vrot.slane %v39, 1
    %v210 = vrot.slane %v40, 1
    %vm211 = vcmp.lt.s32.totalorder %v42, 7
    %v212 = vsel %vm211, %v209, %v210
    %v213 = vsel %vm211, %v208, %v209
    %v214 = vsel %vm211, %v207, %v208
    %v215 = vsel %vm211, %v210, %v207
    %v216 = vsel %vm138, 1, 0
    %v217 = vsel %vm139, 1, 0
    %v218 = vsel %vm140, 1, 0
    %v219 = vsel %vm141, 1, 0
    %vm220 = vcmp.eq.s32.totalorder %v216, 1
    %vm221 = vcmp.eq.s32.totalorder %v217, 1
    %vm222 = vcmp.eq.s32.totalorder %v218, 1
    %vm223 = vcmp.eq.s32.totalorder %v219, 1
    %v224 = vsel %vm220, %v214, 0.0
    %v225 = vsel %vm221, %v213, 0.0
    %v226 = vsel %vm222, %v212, 0.0
    %v227 = vsel %vm223, %v215, 0.0
    %228 = vrot.lane.b32.xlu0 %v224, 8
    %v229 = vpop.permute.xlu0 %228
    %230 = vrot.lane.b32.xlu0 %v225, 8
    %v231 = vpop.permute.xlu0 %230
    %232 = vrot.lane.b32.xlu0 %v226, 8
    %v233 = vpop.permute.xlu0 %232
    %234 = vrot.lane.b32.xlu0 %v227, 8
    %v235 = vpop.permute.xlu0 %234
    %v236 = vadd.f32 %v203, %v229
    %v237 = vadd.f32 %v204, %v231
    %v238 = vadd.f32 %v205, %v233
    %v239 = vadd.f32 %v206, %v235
    %v240 = vpack.c.bf16 %v237, %v236
    %v241 = vpack.c.bf16 %v239, %v238
    %v242 = vld [vmem:[%s2] sm:$0x1]
    %v244 = vperm.slane %v242, 0
    %v262 = vunpack.c.l.b16 %v158
    %v263 = vunpack.c.l.b16 %v159
    %v264 = vunpack.c.l.b16 %v160
    %v265 = vunpack.c.l.b16 %v161
    %v266 = vunpack.c.l.b16 %v162
    %v267 = vunpack.c.l.b16 %v163
    %v268 = vunpack.c.l.b16 %v164
    %v269 = vunpack.c.l.b16 %v165
    %v270 = vunpack.c.l.b16 %v166
    %v271 = vunpack.c.l.b16 %v167
    %v272 = vunpack.c.l.b16 %v168
    %v273 = vunpack.c.l.b16 %v169
    %v274 = vunpack.c.l.b16 %v170
    %v275 = vunpack.c.l.b16 %v171
    %v276 = vunpack.c.l.b16 %v172
    %v277 = vunpack.c.l.b16 %v173
    %v278 = vpack.c.b16 %v263, %v262
    %v279 = vpack.c.b16 %v265, %v264
    %v280 = vpack.c.b16 %v267, %v266
    %v281 = vpack.c.b16 %v269, %v268
    %v282 = vpack.c.b16 %v271, %v270
    %v283 = vpack.c.b16 %v273, %v272
    %v284 = vpack.c.b16 %v275, %v274
    %v285 = vpack.c.b16 %v277, %v276
    %294 = vmatpush.bf16.msra.mxu0 %v285
    %295 = vmatpush.bf16.msra.mxu0 %v284
    %296 = vmatpush.bf16.msra.mxu0 %v283
    %297 = vmatpush.bf16.msra.mxu0 %v282
    %298 = vmatpush.bf16.msra.mxu0 %v281
    %299 = vmatpush.bf16.msra.mxu0 %v280
    %300 = vmatpush.bf16.msra.mxu0 %v279
    %301 = vmatpush.bf16.msra.mxu0 %v278
    %302 = vmatmul.bf16.gmra.mxu0 %v240
    %v303 = vpop.f32.mrf.mxu0
    %v304 = vadd.f32 %v244, %v303
    %v305 = vpop.f32.mrf.mxu0
    %v306 = vadd.f32 %v244, %v305
    %307 = vmatmul.bf16.gmra.mxu0 %v241
    %v308 = vpop.f32.mrf.mxu0
    %v309 = vadd.f32 %v244, %v308
    %v310 = vpop.f32.mrf.mxu0
    %v311 = vadd.f32 %v244, %v310
    %312 = vdwg.mxu0
    %v313 = vmax.f32 %v304, 0.0
    %v314 = vmax.f32 %v306, 0.0
    %v315 = vmax.f32 %v309, 0.0
    %v316 = vmax.f32 %v311, 0.0
    %v317 = vld [vmem:[#allocation2] sm:$0xf]
    %v318 = vld [vmem:[#allocation2 + $0x4] sm:$0xf]
    %v319 = vld [vmem:[#allocation2 + $0x8] sm:$0xf]
    %v320 = vld [vmem:[#allocation2 + $0xc] sm:$0xf]
    %v321 = vld [vmem:[#allocation2 + $0x10] sm:$0xf]
    %v322 = vld [vmem:[#allocation2 + $0x14] sm:$0xf]
    %v323 = vld [vmem:[#allocation2 + $0x18] sm:$0xf]
    %v324 = vld [vmem:[#allocation2 + $0x1c] sm:$0xf]
    %v325 = vld [vmem:[#allocation2 + $0x20] sm:$0xf]
    %v326 = vld [vmem:[#allocation2 + $0x24] sm:$0xf]
    %v327 = vld [vmem:[#allocation2 + $0x28] sm:$0xf]
    %v328 = vld [vmem:[#allocation2 + $0x2c] sm:$0xf]
    %v329 = vld [vmem:[#allocation2 + $0x30] sm:$0xf]
    %v330 = vld [vmem:[#allocation2 + $0x34] sm:$0xf]
    %v331 = vld [vmem:[#allocation2 + $0x38] sm:$0xf]
    %v332 = vld [vmem:[#allocation2 + $0x3c] sm:$0xf]
    %v333 = vrot.slane %v313, 6
    %v334 = vrot.slane %v314, 6
    %v335 = vrot.slane %v315, 6
    %v336 = vrot.slane %v316, 6
    %vm337 = vcmp.lt.s32.totalorder %v42, 2
    %v338 = vsel %vm337, %v335, %v336
    %v339 = vsel %vm337, %v334, %v335
    %v340 = vsel %vm337, %v333, %v334
    %v341 = vsel %vm337, %v336, %v333
    %v342 = vsel %vm106, 1, 0
    %v343 = vsel %vm107, 1, 0
    %v344 = vsel %vm108, 1, 0
    %v345 = vsel %vm109, 1, 0
    %vm346 = vcmp.eq.s32.totalorder %v342, 1
    %vm347 = vcmp.eq.s32.totalorder %v343, 1
    %vm348 = vcmp.eq.s32.totalorder %v344, 1
    %vm349 = vcmp.eq.s32.totalorder %v345, 1
    %v350 = vsel %vm346, %v341, 0.0
    %v351 = vsel %vm347, %v340, 0.0
    %v352 = vsel %vm348, %v339, 0.0
    %v353 = vsel %vm349, %v338, 0.0
    %354 = vrot.lane.b32.xlu0 %v313, 32
    %v355 = vpop.permute.xlu0 %354
    %356 = vrot.lane.b32.xlu0 %v314, 32
    %v357 = vpop.permute.xlu0 %356
    %358 = vrot.lane.b32.xlu0 %v315, 32
    %v359 = vpop.permute.xlu0 %358
    %360 = vrot.lane.b32.xlu0 %v316, 32
    %v361 = vpop.permute.xlu0 %360
    %v362 = vadd.f32 %v350, %v355
    %v363 = vadd.f32 %v351, %v357
    %v364 = vadd.f32 %v352, %v359
    %v365 = vadd.f32 %v353, %v361
    %v366 = vrot.slane %v313, 2
    %v367 = vrot.slane %v314, 2
    %v368 = vrot.slane %v315, 2
    %v369 = vrot.slane %v316, 2
    %vm370 = vcmp.lt.s32.totalorder %v42, 6
    %v371 = vsel %vm370, %v368, %v369
    %v372 = vsel %vm370, %v367, %v368
    %v373 = vsel %vm370, %v366, %v367
    %v374 = vsel %vm370, %v369, %v366
    %v375 = vsel %vm154, 1, 0
    %v376 = vsel %vm155, 1, 0
    %v377 = vsel %vm156, 1, 0
    %v378 = vsel %vm157, 1, 0
    %vm379 = vcmp.eq.s32.totalorder %v375, 1
    %vm380 = vcmp.eq.s32.totalorder %v376, 1
    %vm381 = vcmp.eq.s32.totalorder %v377, 1
    %vm382 = vcmp.eq.s32.totalorder %v378, 1
    %v383 = vsel %vm379, %v373, 0.0
    %v384 = vsel %vm380, %v372, 0.0
    %v385 = vsel %vm381, %v371, 0.0
    %v386 = vsel %vm382, %v374, 0.0
    %387 = vrot.lane.b32.xlu0 %v383, 64
    %v388 = vpop.permute.xlu0 %387
    %389 = vrot.lane.b32.xlu0 %v384, 64
    %v390 = vpop.permute.xlu0 %389
    %391 = vrot.lane.b32.xlu0 %v385, 64
    %v392 = vpop.permute.xlu0 %391
    %393 = vrot.lane.b32.xlu0 %v386, 64
    %v394 = vpop.permute.xlu0 %393
    %v395 = vadd.f32 %v362, %v388
    %v396 = vadd.f32 %v363, %v390
    %v397 = vadd.f32 %v364, %v392
    %v398 = vadd.f32 %v365, %v394
    %v399 = vpack.c.bf16 %v396, %v395
    %v400 = vpack.c.bf16 %v398, %v397
    %v401 = vld [vmem:[%s4] sm:$0x1]
    %v403 = vperm.slane %v401, 0
    %v421 = vunpack.c.l.b16 %v317
    %v422 = vunpack.c.l.b16 %v318
    %v423 = vunpack.c.l.b16 %v319
    %v424 = vunpack.c.l.b16 %v320
    %v425 = vunpack.c.l.b16 %v321
    %v426 = vunpack.c.l.b16 %v322
    %v427 = vunpack.c.l.b16 %v323
    %v428 = vunpack.c.l.b16 %v324
    %v429 = vunpack.c.l.b16 %v325
    %v430 = vunpack.c.l.b16 %v326
    %v431 = vunpack.c.l.b16 %v327
    %v432 = vunpack.c.l.b16 %v328
    %v433 = vunpack.c.l.b16 %v329
    %v434 = vunpack.c.l.b16 %v330
    %v435 = vunpack.c.l.b16 %v331
    %v436 = vunpack.c.l.b16 %v332
    %v437 = vpack.c.b16 %v422, %v421
    %v438 = vpack.c.b16 %v424, %v423
    %v439 = vpack.c.b16 %v426, %v425
    %v440 = vpack.c.b16 %v428, %v427
    %v441 = vpack.c.b16 %v430, %v429
    %v442 = vpack.c.b16 %v432, %v431
    %v443 = vpack.c.b16 %v434, %v433
    %v444 = vpack.c.b16 %v436, %v435
    %453 = vmatpush.bf16.msra.mxu0 %v444
    %454 = vmatpush.bf16.msra.mxu0 %v443
    %455 = vmatpush.bf16.msra.mxu0 %v442
    %456 = vmatpush.bf16.msra.mxu0 %v441
    %457 = vmatpush.bf16.msra.mxu0 %v440
    %458 = vmatpush.bf16.msra.mxu0 %v439
    %459 = vmatpush.bf16.msra.mxu0 %v438
    %460 = vmatpush.bf16.msra.mxu0 %v437
    %461 = vmatmul.bf16.gmra.mxu0 %v399
    %v462 = vpop.f32.mrf.mxu0
    %v463 = vadd.f32 %v403, %v462
    %v464 = vpop.f32.mrf.mxu0
    %v465 = vadd.f32 %v403, %v464
    %466 = vmatmul.bf16.gmra.mxu0 %v400
    %v467 = vpop.f32.mrf.mxu0
    %v468 = vadd.f32 %v403, %v467
    %v469 = vpop.f32.mrf.mxu0
    %v470 = vadd.f32 %v403, %v469
    %471 = vdwg.mxu0
    %v472 = vmax.f32 %v463, 0.0
    %v473 = vmax.f32 %v465, 0.0
    %v474 = vmax.f32 %v468, 0.0
    %v475 = vmax.f32 %v470, 0.0
    %v476 = vadd.f32 %v472, %v473
    %v477 = vrot.slane %v476, 4
    %v478 = vadd.f32 %v476, %v477
    %v479 = vrot.slane %v478, 2
    %v480 = vadd.f32 %v478, %v479
    %v481 = vrot.slane %v480, 1
    %v482 = vadd.f32 %v480, %v481
    %v483 = vadd.f32 %v474, %v475
    %v484 = vrot.slane %v483, 4
    %v485 = vadd.f32 %v483, %v484
    %v486 = vrot.slane %v485, 2
    %v487 = vadd.f32 %v485, %v486
    %v488 = vrot.slane %v487, 1
    %v489 = vadd.f32 %v487, %v488
    %v490 = vrcp.pop 16.0
    %v491 = vmul.f32 16.0, %v490
    %v492 = vsub.f32 1.0, %v491
    %v493 = vmul.f32 %v490, %v492
    %v494 = vadd.f32 %v490, %v493
    %vm495 = vweird.f32 %v490
    %v496 = vsel %vm495, %v490, %v494
    %v497 = vmul.f32 %v482, %v496
    %v498 = vmul.f32 %v489, %v496
    %vm501 = vcmask 1041409
    %v502 = vsel %vm501, %v498, %v497
    %504 = vst [vmem:[#allocation5] sm:$0x3] %v502
    // Predicated region
    $region26: #{tcn_encoder_forward.1} parent=1 // pred_check
      _
    $region27: #{tcn_encoder_forward.1} parent=1 // pred_check_branch
      %506 = sbr.rel (0) target = $region29
    $region28: #{tcn_encoder_forward.1} parent=1 // pred_region
      %508 = vsyncadd [#allocation4], 0
      %s510 = sshll.u32 [#allocation5], 4
      %s511 = int_to_ptr.vmem [resolvable:$true] %s510
      %s512 = sshll.u32 %s5, 4
      %s513 = int_to_ptr.hbm [resolvable:$true] %s512
      %515 = dma.vmem_to_hbm [thread:$0]  %s511, 32, %s513, [#allocation4]
    $region29: #{tcn_encoder_forward.1} parent=1 // pred_fallthru
      _
    // Predicated region
    $region30: #{tcn_encoder_forward.1} parent=1 // pred_check
      _
    $region31: #{tcn_encoder_forward.1} parent=1 // pred_check_branch
      %517 = sbr.rel (0) target = $region33
    $region32: #{tcn_encoder_forward.1} parent=1 // pred_region
      %519 = dma.done [#allocation4], 32
    $region33: #{tcn_encoder_forward.1} parent=1 // pred_fallthru
      _
    %520 = vsyncpa [#allocation3], 1
    %521 = vsyncpa [#allocation4], 1

</llo_original>
